<compile_context>
chip_gen: v7x
topology: tpu7x:2x2x1
jax: 0.10.0
libtpu: 0.0.40
codegen_flags: <defaults>
</compile_context>

<pallas_src>
import jax
import jax.numpy as jnp
from jax.experimental import pallas as pl
from jax.experimental.pallas import tpu as pltpu


def _pick_h_tile(N, H, W):
    """Rows per output tile.  TM = TH*W must be a multiple of 128 (or the full
    image); prefer the largest TM <= 4096 lanes; prefer >= 2 h-tiles when
    N == 1 so the grid has >= 2 parallel cells for v7x's two TensorCores."""
    cands = [th for th in range(1, H + 1)
             if H % th == 0 and ((th * W) % 128 == 0 or th == H)]
    for require_two in (N == 1, False):
        good = [th for th in cands
                if th * W <= 4096 and (not require_two or H // th >= 2)]
        if good:
            return max(good)
    return min(cands)


def twin_conv(x_nchw, w1, b1, w2, b2, r):
    """TwinConv forward.

    x_nchw : (N, Cin, H, W)  float32   (PyTorch layout)
    w1, w2 : (Cout, Cin, 3, 3)         (PyTorch Conv2d weight layout)
    b1, b2 : (Cout,)
    r      : python float / 0-d scalar
    returns: (N, Cout, H, W)
    """
    N, Cin, H, W = x_nchw.shape
    Cout = w1.shape[0]
    K = 9 * Cin
    HW = H * W

    r = jnp.float32(r)
    # --- forward-exact pre-blend of the two convs ---
    w_blend = w1.astype(jnp.float32) * (1.0 - r) + w2.astype(jnp.float32) * r
    b_blend = b1.astype(jnp.float32) * (1.0 - r) + b2.astype(jnp.float32) * r
    # (Cout, Cin, kh, kw) -> (Cout, kh, kw, Cin) -> (Cout, 9*Cin); row order
    # kh*3*Cin + kw*Cin + cin matches the in-kernel tap construction below.
    w_r = jnp.transpose(w_blend, (0, 2, 3, 1)).reshape(Cout, K).astype(jnp.bfloat16)
    b_r = b_blend.reshape(Cout, 1)                       # stays f32

    TH = _pick_h_tile(N, H, W)
    T = H // TH
    TM = TH * W

    # --- light staging pass on the (small) input: pad, expand the 3 kw taps
    # into channels, cut per-tile row windows with a 1-row halo, and merge
    # (rows, W) so the kernel only needs static lane slices.  ~3x the input
    # size in bf16, i.e. tiny next to the Cout=128 f32 output stream.
    x_pad = jnp.pad(x_nchw, ((0, 0), (0, 0), (1, 1), (1, 1)))       # (N,Cin,H+2,W+2)
    x_kw = jnp.concatenate([x_pad[:, :, :, kw:kw + W] for kw in range(3)],
                           axis=1).astype(jnp.bfloat16)             # (N,3Cin,H+2,W)
    x_tiles = jnp.stack(
        [x_kw[:, :, t * TH:t * TH + TH + 2, :].reshape(N, 3 * Cin, (TH + 2) * W)
         for t in range(T)], axis=1)                                # (N,T,3Cin,(TH+2)*W)

    def kernel(x_ref, w_ref, b_ref, o_ref):
        # x_ref: (3Cin, (TH+2)*W) bf16   w_ref: (Cout, 9Cin) bf16
        # b_ref: (Cout, 1) f32           o_ref: (Cout, TM)  (NCHW-direct)
        cols = jnp.concatenate(
            [x_ref[:, kh * W:kh * W + TM] for kh in range(3)], axis=0)  # (9Cin, TM)
        acc = jnp.dot(w_ref[...], cols, preferred_element_type=jnp.float32)
        o_ref[...] = (acc + b_ref[...]).astype(o_ref.dtype)

    bytes_accessed = (x_tiles.size * 2 + w_r.size * 2 + b_r.size * 4
                      + N * Cout * HW * x_nchw.dtype.itemsize)

    out = pl.pallas_call(
        kernel,
        out_shape=jax.ShapeDtypeStruct((N, Cout, HW), x_nchw.dtype),
        grid_spec=pltpu.PrefetchScalarGridSpec(
            num_scalar_prefetch=0,
            grid=(N, T),
            in_specs=[
                pl.BlockSpec((None, None, 3 * Cin, (TH + 2) * W),
                             lambda n, t: (n, t, 0, 0)),       # halo'd input tile
                pl.BlockSpec((Cout, K), lambda n, t: (0, 0)),  # blended weight
                pl.BlockSpec((Cout, 1), lambda n, t: (0, 0)),  # blended bias
            ],
            out_specs=pl.BlockSpec((None, Cout, TM), lambda n, t: (n, 0, t)),
        ),
        compiler_params=pltpu.CompilerParams(
            dimension_semantics=("parallel", "parallel"),
            vmem_limit_bytes=32 * 1024 * 1024),   # explicit budget (v7x-safe)
        cost_estimate=pl.CostEstimate(
            flops=2 * N * HW * K * Cout,
            transcendentals=0,
            bytes_accessed=bytes_accessed),
    )(x_tiles, w_r, b_r)

    return out.reshape(N, Cout, H, W)   # free: already NCHW-ordered


def _reference(x_nchw, w1, b1, w2, b2, r):
    """Pure-JAX reference (lax conv) for correctness checking."""
    def conv(x, w, b):
        y = jax.lax.conv_general_dilated(
            x, w, window_strides=(1, 1), padding=((1, 1), (1, 1)),
            dimension_numbers=("NCHW", "OIHW", "NCHW"))
        return y + b[None, :, None, None]
    return conv(x_nchw, w1, b1) * (1.0 - r) + conv(x_nchw, w2, b2) * r


if __name__ == "__main__":
    # Small deterministic shapes consistent with TwinConv's conv_in layers:
    # Conv2d(Cin=4, Cout=128, kernel_size=3, padding=1).
    N, Cin, H, W, Cout = 2, 4, 16, 16, 128
    r = 0.3

    key = jax.random.PRNGKey(0)
    kx, kw1, kb1, kw2, kb2 = jax.random.split(key, 5)
    x = jax.random.normal(kx, (N, Cin, H, W), dtype=jnp.float32)
    w1 = jax.random.normal(kw1, (Cout, Cin, 3, 3), dtype=jnp.float32) * 0.1
    b1 = jax.random.normal(kb1, (Cout,), dtype=jnp.float32) * 0.1
    w2 = jax.random.normal(kw2, (Cout, Cin, 3, 3), dtype=jnp.float32) * 0.1
    b2 = jax.random.normal(kb2, (Cout,), dtype=jnp.float32) * 0.1

    out = jax.block_until_ready(twin_conv(x, w1, b1, w2, b2, r))
    ref = jax.block_until_ready(_reference(x, w1, b1, w2, b2, r))

    assert out.shape == (N, Cout, H, W)
    # bf16-streamed operands with f32 accumulation: ~1e-2-level agreement.
    assert jnp.allclose(out, ref, atol=3e-2, rtol=3e-2), "mismatch vs reference"

    print("KERNEL_OK")
</pallas_src>

<mosaic_0001>
module attributes {stable_mosaic.version = 11 : i64} {
  func.func @kernel(%arg0: i32, %arg1: i32, %arg2: memref<1x1x12x288xbf16, #tpu.memory_space<vmem>>, %arg3: memref<128x36xbf16, #tpu.memory_space<vmem>>, %arg4: memref<128x1xf32, #tpu.memory_space<vmem>>, %arg5: memref<1x128x256xf32, #tpu.memory_space<vmem>>) attributes {dimension_semantics = [#tpu.dimension_semantics<parallel>, #tpu.dimension_semantics<parallel>], iteration_bounds = array<i64: 2, 1>, scalar_prefetch = 0 : i64, scratch_operands = 0 : i64, tpu.core_type = #tpu.core_type<tc>, window_params = [{transform_indices = @transform_0, window_bounds = array<i64: 1, 1, 12, 288>}, {pipeline_mode = #tpu.pipeline_mode<synchronous>, transform_indices = @transform_1, window_bounds = array<i64: 128, 36>}, {pipeline_mode = #tpu.pipeline_mode<synchronous>, transform_indices = @transform_2, window_bounds = array<i64: 128, 1>}, {transform_indices = @transform_3, window_bounds = array<i64: 1, 128, 256>}]} {
    %c0 = arith.constant 0 : index
    %c0_0 = arith.constant 0 : index
    %c0_1 = arith.constant 0 : index
    %c0_2 = arith.constant 0 : index
    %0 = vector.load %arg2[%c0, %c0_0, %c0_1, %c0_2] : memref<1x1x12x288xbf16, #tpu.memory_space<vmem>>, vector<1x1x12x256xbf16>
    %1 = vector.shape_cast %0 : vector<1x1x12x256xbf16> to vector<12x256xbf16>
    %c0_3 = arith.constant 0 : index
    %c0_4 = arith.constant 0 : index
    %c0_5 = arith.constant 0 : index
    %c16 = arith.constant 16 : index
    %2 = vector.load %arg2[%c0_3, %c0_4, %c0_5, %c16] : memref<1x1x12x288xbf16, #tpu.memory_space<vmem>>, vector<1x1x12x256xbf16>
    %3 = vector.shape_cast %2 : vector<1x1x12x256xbf16> to vector<12x256xbf16>
    %c0_6 = arith.constant 0 : index
    %c0_7 = arith.constant 0 : index
    %c0_8 = arith.constant 0 : index
    %c32 = arith.constant 32 : index
    %4 = vector.load %arg2[%c0_6, %c0_7, %c0_8, %c32] : memref<1x1x12x288xbf16, #tpu.memory_space<vmem>>, vector<1x1x12x256xbf16>
    %5 = vector.shape_cast %4 : vector<1x1x12x256xbf16> to vector<12x256xbf16>
    %6 = tpu.concatenate %1, %3, %5 in 0 : vector<12x256xbf16>, vector<12x256xbf16>, vector<12x256xbf16> -> vector<36x256xbf16>
    %c0_9 = arith.constant 0 : index
    %c0_10 = arith.constant 0 : index
    %7 = vector.load %arg3[%c0_9, %c0_10] : memref<128x36xbf16, #tpu.memory_space<vmem>>, vector<128x36xbf16>
    %cst = arith.constant dense<0.000000e+00> : vector<128x256xf32>
    %8 = tpu.matmul %7, %6, %cst {dimension_numbers = #tpu.dot_dimension_numbers<[1], [0], [0], [1], [0, 0, 1, 1], [], []>} : vector<128x36xbf16>, vector<36x256xbf16>, vector<128x256xf32> -> vector<128x256xf32>
    %c0_11 = arith.constant 0 : index
    %c0_12 = arith.constant 0 : index
    %9 = vector.load %arg4[%c0_11, %c0_12] : memref<128x1xf32, #tpu.memory_space<vmem>>, vector<128x1xf32>
    %10 = vector.broadcast %9 : vector<128x1xf32> to vector<128x256xf32>
    %11 = arith.addf %8, %10 : vector<128x256xf32>
    %c0_13 = arith.constant 0 : index
    %c0_14 = arith.constant 0 : index
    %c0_15 = arith.constant 0 : index
    %12 = vector.load %arg5[%c0_13, %c0_14, %c0_15] : memref<1x128x256xf32, #tpu.memory_space<vmem>>, vector<1x128x256xf32>
    %13 = vector.shape_cast %12 : vector<1x128x256xf32> to vector<128x256xf32>
    %14 = vector.shape_cast %11 : vector<128x256xf32> to vector<1x128x256xf32>
    tpu.vector_store %arg5[%c0_13, %c0_14, %c0_15], %14 {strides = array<i32>} : memref<1x128x256xf32, #tpu.memory_space<vmem>>, vector<1x128x256xf32>,
    return
  }
  func.func @transform_0(%arg0: i32, %arg1: i32) -> (i32, i32, i32, i32) {
    %c0_i32 = arith.constant 0 : i32
    %c0_i32_0 = arith.constant 0 : i32
    %c0_i32_1 = arith.constant 0 : i32
    return %arg0, %arg1, %c0_i32, %c0_i32_0 : i32, i32, i32, i32
  }
  func.func @transform_1(%arg0: i32, %arg1: i32) -> (i32, i32) {
    %c0_i32 = arith.constant 0 : i32
    %c0_i32_0 = arith.constant 0 : i32
    %c0_i32_1 = arith.constant 0 : i32
    return %c0_i32, %c0_i32_0 : i32, i32
  }
  func.func @transform_2(%arg0: i32, %arg1: i32) -> (i32, i32) {
    %c0_i32 = arith.constant 0 : i32
    %c0_i32_0 = arith.constant 0 : i32
    %c0_i32_1 = arith.constant 0 : i32
    return %c0_i32, %c0_i32_0 : i32, i32
  }
  func.func @transform_3(%arg0: i32, %arg1: i32) -> (i32, i32, i32) {
    %c0_i32 = arith.constant 0 : i32
    %c0_i32_0 = arith.constant 0 : i32
    return %arg0, %c0_i32, %arg1 : i32, i32, i32
  }
}

</mosaic_0001>

<llo_original>
// kernel: tpu_custom_call.1
$region0: #{tpu_custom_call.1}
  #allocation0 [shape = 'u32[]', space=smem, size = 0x4, offset = 0x4, fixed_abs, tag = 'smem constant byte address 0x4 - core index']
  #allocation1 [shape = 'u32[144,128]{1,0:T(1,128)}', space=vmem, size = 0x12000, scoped, tag = 'internal scratch']
  %s0 = inlined_call_operand.vmem [shape: bf16[2,1,12,288], index: 0, kind: input, shape index: {}]
  %s1 = inlined_call_operand.vmem [shape: bf16[128,36], index: 1, kind: input, shape index: {}]
  %s2 = inlined_call_operand.vmem [shape: f32[128,1], index: 2, kind: input, shape index: {}]
  %s3 = inlined_call_operand.hbm [shape: f32[2,128,256], index: 3, kind: output, shape index: {}]
  %s4 = sld [smem:[#allocation0]]
  $region45: #{tpu_custom_call.1} parent=0
    _
  %s6 = ssub.s32 1, %s4
  %s7 = scalar_select 0, %s6, %s4
  $region1: #{tpu_custom_call.1} parent=0
    #allocation2 [shape = 'u8[262144]{0}', space=vmem, size = 0x40000, scoped, tag = 'output window, operand 0']
    #allocation3 [shape = 's32[2]{0}', space=sflag, size = 0x8, scoped, tag = 'scoped memory for tpu_custom_call.1']
    %8 = vsyncpa [#allocation3], 0
    %s9 = scalar_lea.sflag [#allocation3], 1
    %10 = vsyncpa %s9, 0
    loop: start=0, step=1, limit=4
    $region2: #{tpu_custom_call.1} parent=1 // loop_pre_header
      _
    $region3: #{tpu_custom_call.1} parent=1 // loop_header
      %s12 = sphi 0, %s16
      %p13 = scmp.ge.s32.totalorder %s12, 4
      %s19 = sphi 0, %s31
      %s20 = sphi 0, %s27
      %s21 = sphi 0, %s19
      %s22 = sphi 0, %s20
      %s23 = sphi 0, %s21
      %s24 = sphi 0, %s22
      %s36 = sphi 0, %s38
      %s39 = sphi 0, %s36
      %s40 = sphi 0, %s39
      %s56 = sphi 0, %s40
      %s60 = sphi 0, %s60
      %s62 = sphi 0, %s60
      %s63 = sphi 0, %s62
      %s77 = sphi 0, %s63
      %s81 = sphi 0, %s81
      %s83 = sphi 0, %s81
      %s84 = sphi 0, %s83
      %s98 = sphi 0, %s84
      %s106 = sphi 0, %s108
      %s109 = sphi 0, %s106
      %s110 = sphi 0, %s109
      %s126 = sphi 0, %s110
    $region4: #{tpu_custom_call.1} parent=1 // loop_header_branch
      %15 = sbr.rel (%p13) target = $region8
    $region5: #{tpu_custom_call.1} parent=1 // loop_body
      %s17 = ssub.s32 %s12, 1
      %s18 = ssub.s32 %s12, 2
      %s25 = sadd.s32 1, %s20
      %p26 = scmp.ge.s32.totalorder %s25, 1
      %s27 = scalar_select %p26, 0, %s25
      %s28 = sadd.s32 1, %s19
      %s29 = scalar_select %p26, %s28, %s19
      %p30 = scmp.ge.s32.totalorder %s29, 2
      %s31 = scalar_select %p30, 0, %s29
      %s32 = ssub.s32 %s19, %s31
      %s33 = ssub.s32 %s20, %s27
      %s34 = sor.u32 %s32, %s33
      %p35 = scmp.eq.s32.totalorder %s34, 0
      %s37 = sadd.s32 %s36, 1
      %s38 = scalar_select %p35, %s36, %s37
      %p41 = pneg %p35
      %p42 = scmp.eq.s32.totalorder %s12, 1
      %p43 = por %p41, %p42
      %p44 = scmp.ne.s32.totalorder %s36, %s39
      %p45 = scmp.eq.s32.totalorder %s12, 0
      %p46 = por %p44, %p45
      %p47 = scmp.ne.s32.totalorder %s36, %s39
      %p48 = scmp.eq.s32.totalorder %s17, 1
      %p49 = por %p47, %p48
      %p50 = scmp.ne.s32.totalorder %s39, %s40
      %p51 = scmp.eq.s32.totalorder %s17, 0
      %p52 = por %p50, %p51
      %p53 = scmp.ne.s32.totalorder %s39, %s40
      %p54 = scmp.eq.s32.totalorder %s18, 1
      %p55 = por %p53, %p54
      %p57 = scmp.ne.s32.totalorder %s40, %s56
      %p58 = scmp.eq.s32.totalorder %s18, 0
      %p59 = por %p57, %p58
      %s61 = sadd.s32 %s60, 1
      %p64 = scmp.eq.s32.totalorder %s12, 1
      %p65 = scmp.ne.s32.totalorder %s60, %s62
      %p66 = scmp.eq.s32.totalorder %s12, 0
      %p67 = por %p65, %p66
      %p68 = scmp.ne.s32.totalorder %s60, %s62
      %p69 = scmp.eq.s32.totalorder %s17, 1
      %p70 = por %p68, %p69
      %p71 = scmp.ne.s32.totalorder %s62, %s63
      %p72 = scmp.eq.s32.totalorder %s17, 0
      %p73 = por %p71, %p72
      %p74 = scmp.ne.s32.totalorder %s62, %s63
      %p75 = scmp.eq.s32.totalorder %s18, 1
      %p76 = por %p74, %p75
      %p78 = scmp.ne.s32.totalorder %s63, %s77
      %p79 = scmp.eq.s32.totalorder %s18, 0
      %p80 = por %p78, %p79
      %s82 = sadd.s32 %s81, 1
      %p85 = scmp.eq.s32.totalorder %s12, 1
      %p86 = scmp.ne.s32.totalorder %s81, %s83
      %p87 = scmp.eq.s32.totalorder %s12, 0
      %p88 = por %p86, %p87
      %p89 = scmp.ne.s32.totalorder %s81, %s83
      %p90 = scmp.eq.s32.totalorder %s17, 1
      %p91 = por %p89, %p90
      %p92 = scmp.ne.s32.totalorder %s83, %s84
      %p93 = scmp.eq.s32.totalorder %s17, 0
      %p94 = por %p92, %p93
      %p95 = scmp.ne.s32.totalorder %s83, %s84
      %p96 = scmp.eq.s32.totalorder %s18, 1
      %p97 = por %p95, %p96
      %p99 = scmp.ne.s32.totalorder %s84, %s98
      %p100 = scmp.eq.s32.totalorder %s18, 0
      %p101 = por %p99, %p100
      %s102 = ssub.s32 %s19, %s31
      %s103 = ssub.s32 %s20, %s27
      %s104 = sor.u32 %s102, %s103
      %p105 = scmp.eq.s32.totalorder %s104, 0
      %s107 = sadd.s32 %s106, 1
      %s108 = scalar_select %p105, %s106, %s107
      %p111 = pneg %p105
      %p112 = scmp.eq.s32.totalorder %s12, 1
      %p113 = por %p111, %p112
      %p114 = scmp.ne.s32.totalorder %s106, %s109
      %p115 = scmp.eq.s32.totalorder %s12, 0
      %p116 = por %p114, %p115
      %p117 = scmp.ne.s32.totalorder %s106, %s109
      %p118 = scmp.eq.s32.totalorder %s17, 1
      %p119 = por %p117, %p118
      %p120 = scmp.ne.s32.totalorder %s109, %s110
      %p121 = scmp.eq.s32.totalorder %s17, 0
      %p122 = por %p120, %p121
      %p123 = scmp.ne.s32.totalorder %s109, %s110
      %p124 = scmp.eq.s32.totalorder %s18, 1
      %p125 = por %p123, %p124
      %p127 = scmp.ne.s32.totalorder %s110, %s126
      %p128 = scmp.eq.s32.totalorder %s18, 0
      %p129 = por %p127, %p128
      %p130 = scmp.le.s32.totalorder 1, %s12
      %p131 = scmp.lt.s32.totalorder %s12, 3
      %p132 = pnand %p130, %p131
      %p133 = pneg %p132
      // Predicated region
      $region9: #{tpu_custom_call.1} parent=5 // pred_check
        _
      $region10: #{tpu_custom_call.1} parent=5 // pred_check_branch
        %135 = sbr.rel (%p132) target = $region12
      $region11: #{tpu_custom_call.1} parent=5 // pred_region
        %s136 = ssub.s32 %s12, 1
        // Predicated region
        $region13: #{tpu_custom_call.1} parent=11 // pred_check
          %p137 = pneg %p73
        $region14: #{tpu_custom_call.1} parent=11 // pred_check_branch
          %139 = sbr.rel (%p137) target = $region16
        $region15: #{tpu_custom_call.1} parent=11 // pred_region
          _
        $region16: #{tpu_custom_call.1} parent=11 // pred_fallthru
          _
        // Predicated region
        $region17: #{tpu_custom_call.1} parent=11 // pred_check
          %p140 = pneg %p94
        $region18: #{tpu_custom_call.1} parent=11 // pred_check_branch
          %142 = sbr.rel (%p140) target = $region20
        $region19: #{tpu_custom_call.1} parent=11 // pred_region
          _
        $region20: #{tpu_custom_call.1} parent=11 // pred_fallthru
          _
      $region12: #{tpu_custom_call.1} parent=5 // pred_fallthru
        _
      %p143 = scmp.lt.s32.totalorder %s12, 2
      // Predicated region
      $region21: #{tpu_custom_call.1} parent=5 // pred_check
        %p144 = pneg %p143
      $region22: #{tpu_custom_call.1} parent=5 // pred_check_branch
        %146 = sbr.rel (%p144) target = $region24
      $region23: #{tpu_custom_call.1} parent=5 // pred_region
        // Predicated region
        $region25: #{tpu_custom_call.1} parent=23 // pred_check
          %p147 = pneg %p46
        $region26: #{tpu_custom_call.1} parent=23 // pred_check_branch
          %149 = sbr.rel (%p147) target = $region28
        $region27: #{tpu_custom_call.1} parent=23 // pred_region
          %p150 = scmp.lt.s32.totalorder %s19, 1
          %s151 = scalar_select %p150, %s19, 1
          %p152 = scmp.lt.s32.totalorder %s20, 0
          %s153 = scalar_select %p152, %s20, 0
          %s154 = smul.addr %s153, 6
          %s155 = smul.addr %s151, 6
          %s156 = sadd.s32 %s154, %s155
          %s157 = smul.addr %s156, 4
          %s158 = scalar_lea.vmem %s0, %s157
        $region28: #{tpu_custom_call.1} parent=23 // pred_fallthru
          _
      $region24: #{tpu_custom_call.1} parent=5 // pred_fallthru
        _
      %p159 = scmp.le.s32.totalorder 1, %s12
      %p160 = scmp.lt.s32.totalorder %s12, 3
      %p161 = pnand %p159, %p160
      %p162 = pneg %p161
      // Predicated region
      $region29: #{tpu_custom_call.1} parent=5 // pred_check
        _
      $region30: #{tpu_custom_call.1} parent=5 // pred_check_branch
        %164 = sbr.rel (%p161) target = $region32
      $region31: #{tpu_custom_call.1} parent=5 // pred_region
        %s165 = ssub.s32 %s12, 1
        %p166 = scmp.lt.s32.totalorder %s21, 1
        %s167 = scalar_select %p166, %s21, 1
        %p168 = scmp.lt.s32.totalorder %s22, 0
        %s169 = scalar_select %p168, %s22, 0
        %s170 = smul.addr %s169, 6
        %s171 = smul.addr %s167, 6
        %s172 = sadd.s32 %s170, %s171
        %s173 = smul.addr %s172, 4
        %s174 = scalar_lea.vmem %s0, %s173
        %p175 = pneg %p52
        %p176 = pneg %p49
        %p177 = pneg %p73
        %p178 = pneg %p70
        %p179 = pneg %p94
        %p180 = pneg %p91
        %p181 = pneg %p122
        %p182 = pneg %p119
        %s183 = sand.u32 %s109, 1
        %s184 = scalar_lea.sflag [#allocation3], %s183
        %s185 = sand.u32 %s109, 1
        %s186 = smul.addr %s185, 256
        %s187 = scalar_lea.vmem [#allocation2], %s186
        %p188 = scmp.lt.s32.totalorder %s21, 1
        %s189 = scalar_select %p188, %s21, 1
        %p190 = scmp.lt.s32.totalorder %s22, 0
        %s191 = scalar_select %p190, %s22, 0
        %s192 = smul.addr %s191, 6
        %s193 = smul.addr %s189, 6
        %s194 = sadd.s32 %s192, %s193
        %s195 = smul.addr %s194, 4
        %s196 = scalar_lea.vmem %s0, %s195
        %s197 = smul.u32 2, %s22
        %v199 = vld [vmem:[%s196] sm:$0xff]
        %v200 = vld [vmem:[%s196 + $0xc] sm:$0x33]
        %v201 = vld [vmem:[%s196 + $0x8] sm:$0xf]
        %v202 = vld [vmem:[%s196 + $0x14] sm:$0x3]
        %v205 = vunpack.c.l.b16 %v199
        %v206 = vunpack.c.h.b16 %v199
        %v207 = vunpack.c.l.b16 %v200
        %v208 = vunpack.c.h.b16 %v200
        %v209 = vpack.c.b16 %v207, %v205
        %v210 = vpack.c.b16 %v208, %v206
        %v213 = vunpack.c.l.b16 %v201
        %v214 = vunpack.c.l.b16 %v202
        %v215 = vpack.c.b16 %v214, %v213
        %v216 = vrot.slane %v209, 2
        %v217 = vrot.slane %v210, 2
        %v218 = vrot.slane %v215, 2
        %219 = vrot.lane.b32.xlu0 %v216, 112
        %v220 = vpop.permute.xlu0 %219
        %221 = vrot.lane.b32.xlu0 %v217, 112
        %v222 = vpop.permute.xlu0 %221
        %223 = vrot.lane.b32.xlu0 %v218, 112
        %v224 = vpop.permute.xlu0 %223
        %vm225 = vcmask 916480
        %v226 = vsel %vm225, %v220, %v222
        %v227 = vsel %vm225, %v222, %v224
        %v228 = vpack.c.b16 %v205, %v205
        %v229 = vpack.c.b16 %v206, %v206
        %v230 = vpack.c.b16 %v213, %v213
        %v231 = vpack.c.b16 %v207, %v207
        %v232 = vpack.c.b16 %v208, %v208
        %v233 = vpack.c.b16 %v214, %v214
        %234 = vrot.lane.b32.xlu0 %v228, 96
        %v235 = vpop.permute.xlu0 %234
        %236 = vrot.lane.b32.xlu0 %v229, 96
        %v237 = vpop.permute.xlu0 %236
        %238 = vrot.lane.b32.xlu0 %v230, 96
        %v239 = vpop.permute.xlu0 %238
        %240 = vrot.lane.b32.xlu0 %v231, 96
        %v241 = vpop.permute.xlu0 %240
        %242 = vrot.lane.b32.xlu0 %v232, 96
        %v243 = vpop.permute.xlu0 %242
        %244 = vrot.lane.b32.xlu0 %v233, 96
        %v245 = vpop.permute.xlu0 %244
        %vm246 = vcmask 785408
        %v247 = vsel %vm246, %v235, %v237
        %v248 = vsel %vm246, %v237, %v239
        %v249 = vsel %vm246, %v241, %v243
        %v250 = vsel %vm246, %v243, %v245
        %vm251 = vcmask 1045504
        %v254 = vsel %vm251, %v209, %v226
        %v258 = vsel %vm251, %v210, %v227
        %vm260 = vcmask 1043456
        %v262 = vsel %vm260, %v226, %v247
        %v265 = vsel %vm260, %v227, %v248
        %v267 = vld [vmem:[%s1] sm:$0xf]
        %v268 = vld [vmem:[%s1 + $0x4] sm:$0xf]
        %v269 = vld [vmem:[%s1 + $0x8] sm:$0xf]
        %v270 = vld [vmem:[%s1 + $0xc] sm:$0xf]
        %v271 = vld [vmem:[%s1 + $0x10] sm:$0xf]
        %v272 = vld [vmem:[%s1 + $0x14] sm:$0xf]
        %v273 = vld [vmem:[%s1 + $0x18] sm:$0xf]
        %v274 = vld [vmem:[%s1 + $0x1c] sm:$0xf]
        %v275 = vld [vmem:[%s1 + $0x20] sm:$0xf]
        %v276 = vld [vmem:[%s1 + $0x24] sm:$0xf]
        %v277 = vld [vmem:[%s1 + $0x28] sm:$0xf]
        %v278 = vld [vmem:[%s1 + $0x2c] sm:$0xf]
        %v279 = vld [vmem:[%s1 + $0x30] sm:$0xf]
        %v280 = vld [vmem:[%s1 + $0x34] sm:$0xf]
        %v281 = vld [vmem:[%s1 + $0x38] sm:$0xf]
        %v282 = vld [vmem:[%s1 + $0x3c] sm:$0xf]
        %v283 = vld [vmem:[%s2] sm:$0xff]
        %v284 = vld [vmem:[%s2 + $0x8] sm:$0xff]
        %v285 = vld [vmem:[%s2 + $0x10] sm:$0xff]
        %v286 = vld [vmem:[%s2 + $0x18] sm:$0xff]
        %v287 = vld [vmem:[%s2 + $0x20] sm:$0xff]
        %v288 = vld [vmem:[%s2 + $0x28] sm:$0xff]
        %v289 = vld [vmem:[%s2 + $0x30] sm:$0xff]
        %v290 = vld [vmem:[%s2 + $0x38] sm:$0xff]
        %v291 = vld [vmem:[%s2 + $0x40] sm:$0xff]
        %v292 = vld [vmem:[%s2 + $0x48] sm:$0xff]
        %v293 = vld [vmem:[%s2 + $0x50] sm:$0xff]
        %v294 = vld [vmem:[%s2 + $0x58] sm:$0xff]
        %v295 = vld [vmem:[%s2 + $0x60] sm:$0xff]
        %v296 = vld [vmem:[%s2 + $0x68] sm:$0xff]
        %v297 = vld [vmem:[%s2 + $0x70] sm:$0xff]
        %v298 = vld [vmem:[%s2 + $0x78] sm:$0xff]
        %300 = vset.pattern.permute.xlu0 0
        %301 = vperm.xlu0 %300, %v283
        %v302 = vpop.permute.xlu0 %301
        %305 = vset.pattern.permute.xlu0 0
        %306 = vperm.xlu0 %305, %v284
        %v307 = vpop.permute.xlu0 %306
        %310 = vset.pattern.permute.xlu0 0
        %311 = vperm.xlu0 %310, %v285
        %v312 = vpop.permute.xlu0 %311
        %315 = vset.pattern.permute.xlu0 0
        %316 = vperm.xlu0 %315, %v286
        %v317 = vpop.permute.xlu0 %316
        %320 = vset.pattern.permute.xlu0 0
        %321 = vperm.xlu0 %320, %v287
        %v322 = vpop.permute.xlu0 %321
        %325 = vset.pattern.permute.xlu0 0
        %326 = vperm.xlu0 %325, %v288
        %v327 = vpop.permute.xlu0 %326
        %330 = vset.pattern.permute.xlu0 0
        %331 = vperm.xlu0 %330, %v289
        %v332 = vpop.permute.xlu0 %331
        %335 = vset.pattern.permute.xlu0 0
        %336 = vperm.xlu0 %335, %v290
        %v337 = vpop.permute.xlu0 %336
        %340 = vset.pattern.permute.xlu0 0
        %341 = vperm.xlu0 %340, %v291
        %v342 = vpop.permute.xlu0 %341
        %345 = vset.pattern.permute.xlu0 0
        %346 = vperm.xlu0 %345, %v292
        %v347 = vpop.permute.xlu0 %346
        %350 = vset.pattern.permute.xlu0 0
        %351 = vperm.xlu0 %350, %v293
        %v352 = vpop.permute.xlu0 %351
        %355 = vset.pattern.permute.xlu0 0
        %356 = vperm.xlu0 %355, %v294
        %v357 = vpop.permute.xlu0 %356
        %360 = vset.pattern.permute.xlu0 0
        %361 = vperm.xlu0 %360, %v295
        %v362 = vpop.permute.xlu0 %361
        %365 = vset.pattern.permute.xlu0 0
        %366 = vperm.xlu0 %365, %v296
        %v367 = vpop.permute.xlu0 %366
        %370 = vset.pattern.permute.xlu0 0
        %371 = vperm.xlu0 %370, %v297
        %v372 = vpop.permute.xlu0 %371
        %375 = vset.pattern.permute.xlu0 0
        %376 = vperm.xlu0 %375, %v298
        %v377 = vpop.permute.xlu0 %376
        %v395 = vunpack.c.l.b16 %v267
        %v396 = vunpack.c.l.b16 %v268
        %v397 = vunpack.c.l.b16 %v269
        %v398 = vunpack.c.l.b16 %v270
        %v399 = vunpack.c.l.b16 %v271
        %v400 = vunpack.c.l.b16 %v272
        %v401 = vunpack.c.l.b16 %v273
        %v402 = vunpack.c.l.b16 %v274
        %v403 = vunpack.c.l.b16 %v275
        %v404 = vunpack.c.l.b16 %v276
        %v405 = vunpack.c.l.b16 %v277
        %v406 = vunpack.c.l.b16 %v278
        %v407 = vunpack.c.l.b16 %v279
        %v408 = vunpack.c.l.b16 %v280
        %v409 = vunpack.c.l.b16 %v281
        %v410 = vunpack.c.l.b16 %v282
        %v411 = vpack.c.b16 %v396, %v395
        %v412 = vpack.c.b16 %v398, %v397
        %v413 = vpack.c.b16 %v400, %v399
        %v414 = vpack.c.b16 %v402, %v401
        %v415 = vpack.c.b16 %v404, %v403
        %v416 = vpack.c.b16 %v406, %v405
        %v417 = vpack.c.b16 %v408, %v407
        %v418 = vpack.c.b16 %v410, %v409
        %vm419 = vcmask 293888
        %v421 = vsel %vm419, %v411, 0
        %v424 = vsel %vm419, %v412, 0
        %v427 = vsel %vm419, %v413, 0
        %v430 = vsel %vm419, %v414, 0
        %v433 = vsel %vm419, %v415, 0
        %v436 = vsel %vm419, %v416, 0
        %v439 = vsel %vm419, %v417, 0
        %v442 = vsel %vm419, %v418, 0
        %vm444 = vcmask 1041408
        %v446 = vsel %vm444, %v249, 0
        %v449 = vsel %vm444, %v250, 0
        %451 = vmatprep.subr.bf16.mxu0 %v258
        %452 = vmatpush1.bf16.msra.mxu0 %v254
        %453 = vmatprep.subr.bf16.mxu0 %v265
        %454 = vmatpush1.bf16.msra.mxu0 %v262
        %455 = vmatprep.subr.bf16.mxu0 %v449
        %456 = vmatpush1.bf16.msra.mxu0 %v446
        %457 = vmatprep.subr.bf16.mxu0 0
        %458 = vmatpush1.bf16.msra.mxu0 0
        %459 = vmatprep.subr.bf16.mxu0 0
        %460 = vmatpush1.bf16.msra.mxu0 0
        %461 = vmatprep.subr.bf16.mxu0 0
        %462 = vmatpush1.bf16.msra.mxu0 0
        %463 = vmatprep.subr.bf16.mxu0 0
        %464 = vmatpush1.bf16.msra.mxu0 0
        %465 = vmatprep.subr.bf16.mxu0 0
        %466 = vmatpush1.bf16.msra.mxu0 0
        %467 = vmatprep.subr.bf16.mxu0 0
        %468 = vmatpush1.bf16.msra.mxu0 0
        %469 = vmatprep.subr.bf16.mxu0 0
        %470 = vmatpush1.bf16.msra.mxu0 0
        %471 = vmatprep.subr.bf16.mxu0 0
        %472 = vmatpush1.bf16.msra.mxu0 0
        %473 = vmatprep.subr.bf16.mxu0 0
        %474 = vmatpush1.bf16.msra.mxu0 0
        %475 = vmatprep.subr.bf16.mxu0 0
        %476 = vmatpush1.bf16.msra.mxu0 0
        %477 = vmatprep.subr.bf16.mxu0 0
        %478 = vmatpush1.bf16.msra.mxu0 0
        %479 = vmatprep.subr.bf16.mxu0 0
        %480 = vmatpush1.bf16.msra.mxu0 0
        %481 = vmatprep.subr.bf16.mxu0 0
        %482 = vmatpush1.bf16.msra.mxu0 0
        %483 = vmatprep.mubr.bf16.mxu0 0
        %484 = vmatmul.mubr.bf16.gmra.mrb[0].mxu0 %v421
        %v485 = vpop.f32.mrb[0].mxu0
        %v486 = vadd.f32 %v302, %v485
        %v487 = vpop.f32.mrb[0].mxu0
        %v488 = vadd.f32 %v302, %v487
        %v489 = vpop.f32.mrb[0].mxu0
        %v490 = vadd.f32 %v307, %v489
        %v491 = vpop.f32.mrb[0].mxu0
        %v492 = vadd.f32 %v307, %v491
        %493 = vmatprep.mubr.bf16.mxu0 0
        %494 = vmatmul.mubr.bf16.gmra.mrb[0].mxu0 %v424
        %v495 = vpop.f32.mrb[0].mxu0
        %v496 = vadd.f32 %v312, %v495
        %v497 = vpop.f32.mrb[0].mxu0
        %v498 = vadd.f32 %v312, %v497
        %v499 = vpop.f32.mrb[0].mxu0
        %v500 = vadd.f32 %v317, %v499
        %v501 = vpop.f32.mrb[0].mxu0
        %v502 = vadd.f32 %v317, %v501
        %503 = vmatprep.mubr.bf16.mxu0 0
        %504 = vmatmul.mubr.bf16.gmra.mrb[0].mxu0 %v427
        %v505 = vpop.f32.mrb[0].mxu0
        %v506 = vadd.f32 %v322, %v505
        %v507 = vpop.f32.mrb[0].mxu0
        %v508 = vadd.f32 %v322, %v507
        %v509 = vpop.f32.mrb[0].mxu0
        %v510 = vadd.f32 %v327, %v509
        %v511 = vpop.f32.mrb[0].mxu0
        %v512 = vadd.f32 %v327, %v511
        %513 = vmatprep.mubr.bf16.mxu0 0
        %514 = vmatmul.mubr.bf16.gmra.mrb[0].mxu0 %v430
        %v515 = vpop.f32.mrb[0].mxu0
        %v516 = vadd.f32 %v332, %v515
        %v517 = vpop.f32.mrb[0].mxu0
        %v518 = vadd.f32 %v332, %v517
        %v519 = vpop.f32.mrb[0].mxu0
        %v520 = vadd.f32 %v337, %v519
        %v521 = vpop.f32.mrb[0].mxu0
        %v522 = vadd.f32 %v337, %v521
        %523 = vmatprep.mubr.bf16.mxu0 0
        %524 = vmatmul.mubr.bf16.gmra.mrb[0].mxu0 %v433
        %v525 = vpop.f32.mrb[0].mxu0
        %v526 = vadd.f32 %v342, %v525
        %v527 = vpop.f32.mrb[0].mxu0
        %v528 = vadd.f32 %v342, %v527
        %v529 = vpop.f32.mrb[0].mxu0
        %v530 = vadd.f32 %v347, %v529
        %v531 = vpop.f32.mrb[0].mxu0
        %v532 = vadd.f32 %v347, %v531
        %533 = vmatprep.mubr.bf16.mxu0 0
        %534 = vmatmul.mubr.bf16.gmra.mrb[0].mxu0 %v436
        %v535 = vpop.f32.mrb[0].mxu0
        %v536 = vadd.f32 %v352, %v535
        %v537 = vpop.f32.mrb[0].mxu0
        %v538 = vadd.f32 %v352, %v537
        %v539 = vpop.f32.mrb[0].mxu0
        %v540 = vadd.f32 %v357, %v539
        %v541 = vpop.f32.mrb[0].mxu0
        %v542 = vadd.f32 %v357, %v541
        %543 = vmatprep.mubr.bf16.mxu0 0
        %544 = vmatmul.mubr.bf16.gmra.mrb[0].mxu0 %v439
        %v545 = vpop.f32.mrb[0].mxu0
        %v546 = vadd.f32 %v362, %v545
        %v547 = vpop.f32.mrb[0].mxu0
        %v548 = vadd.f32 %v362, %v547
        %v549 = vpop.f32.mrb[0].mxu0
        %v550 = vadd.f32 %v367, %v549
        %v551 = vpop.f32.mrb[0].mxu0
        %v552 = vadd.f32 %v367, %v551
        %553 = vmatprep.mubr.bf16.mxu0 0
        %554 = vmatmul.mubr.bf16.gmra.mrb[0].mxu0 %v442
        %v555 = vpop.f32.mrb[0].mxu0
        %v556 = vadd.f32 %v372, %v555
        %v557 = vpop.f32.mrb[0].mxu0
        %v558 = vadd.f32 %v372, %v557
        %v559 = vpop.f32.mrb[0].mxu0
        %v560 = vadd.f32 %v377, %v559
        %v561 = vpop.f32.mrb[0].mxu0
        %v562 = vadd.f32 %v377, %v561
        %563 = vdwg.mxu0
        %564 = vst [vmem:[%s187] sm:$0xff] %v486
        %565 = vst [vmem:[%s187 + $0x8] sm:$0xff] %v488
        %566 = vst [vmem:[%s187 + $0x10] sm:$0xff] %v490
        %567 = vst [vmem:[%s187 + $0x18] sm:$0xff] %v492
        %568 = vst [vmem:[%s187 + $0x20] sm:$0xff] %v496
        %569 = vst [vmem:[%s187 + $0x28] sm:$0xff] %v498
        %570 = vst [vmem:[%s187 + $0x30] sm:$0xff] %v500
        %571 = vst [vmem:[%s187 + $0x38] sm:$0xff] %v502
        %572 = vst [vmem:[%s187 + $0x40] sm:$0xff] %v506
        %573 = vst [vmem:[%s187 + $0x48] sm:$0xff] %v508
        %574 = vst [vmem:[%s187 + $0x50] sm:$0xff] %v510
        %575 = vst [vmem:[%s187 + $0x58] sm:$0xff] %v512
        %576 = vst [vmem:[%s187 + $0x60] sm:$0xff] %v516
        %577 = vst [vmem:[%s187 + $0x68] sm:$0xff] %v518
        %578 = vst [vmem:[%s187 + $0x70] sm:$0xff] %v520
        %579 = vst [vmem:[%s187 + $0x78] sm:$0xff] %v522
        %580 = vst [vmem:[%s187 + $0x80] sm:$0xff] %v526
        %581 = vst [vmem:[%s187 + $0x88] sm:$0xff] %v528
        %582 = vst [vmem:[%s187 + $0x90] sm:$0xff] %v530
        %583 = vst [vmem:[%s187 + $0x98] sm:$0xff] %v532
        %584 = vst [vmem:[%s187 + $0xa0] sm:$0xff] %v536
        %585 = vst [vmem:[%s187 + $0xa8] sm:$0xff] %v538
        %586 = vst [vmem:[%s187 + $0xb0] sm:$0xff] %v540
        %587 = vst [vmem:[%s187 + $0xb8] sm:$0xff] %v542
        %588 = vst [vmem:[%s187 + $0xc0] sm:$0xff] %v546
        %589 = vst [vmem:[%s187 + $0xc8] sm:$0xff] %v548
        %590 = vst [vmem:[%s187 + $0xd0] sm:$0xff] %v550
        %591 = vst [vmem:[%s187 + $0xd8] sm:$0xff] %v552
        %592 = vst [vmem:[%s187 + $0xe0] sm:$0xff] %v556
        %593 = vst [vmem:[%s187 + $0xe8] sm:$0xff] %v558
        %594 = vst [vmem:[%s187 + $0xf0] sm:$0xff] %v560
        %595 = vst [vmem:[%s187 + $0xf8] sm:$0xff] %v562
        %s596 = sand.u32 %s109, 1
        %s597 = scalar_lea.sflag [#allocation3], %s596
        %s598 = sand.u32 %s109, 1
        %s599 = smul.addr %s598, 256
        %s600 = scalar_lea.vmem [#allocation2], %s599
        // Predicated region
        $region33: #{tpu_custom_call.1} parent=31 // pred_check
          %p601 = pneg %p119
        $region34: #{tpu_custom_call.1} parent=31 // pred_check_branch
          %603 = sbr.rel (%p601) target = $region36
        $region35: #{tpu_custom_call.1} parent=31 // pred_region
          %s604 = smul.u32 2, %s22
          %s606 = ssub.s32 4096, 4096
          %607 = vsyncadd %s597, %s606
          %s608 = smul.addr %s21, 32
          %s609 = sadd.s32 %s604, %s608
          %s610 = smul.addr %s609, 128
          %s611 = scalar_lea.hbm %s3, %s610
          %s612 = sshll.u32 %s600, 4
          %s613 = int_to_ptr.vmem [resolvable:$true] %s612
          %618 = dma.vmem_to_hbm [thread:$0]  %s613, 4096, %s611, %s597, 256, 256, 16
        $region36: #{tpu_custom_call.1} parent=31 // pred_fallthru
          _
      $region32: #{tpu_custom_call.1} parent=5 // pred_fallthru
        _
      %p619 = scmp.le.s32.totalorder 2, %s12
      // Predicated region
      $region37: #{tpu_custom_call.1} parent=5 // pred_check
        %p620 = pneg %p619
      $region38: #{tpu_custom_call.1} parent=5 // pred_check_branch
        %622 = sbr.rel (%p620) target = $region40
      $region39: #{tpu_custom_call.1} parent=5 // pred_region
        %s623 = ssub.s32 %s12, 2
        // Predicated region
        $region41: #{tpu_custom_call.1} parent=39 // pred_check
          %p624 = pneg %p125
        $region42: #{tpu_custom_call.1} parent=39 // pred_check_branch
          %626 = sbr.rel (%p624) target = $region44
        $region43: #{tpu_custom_call.1} parent=39 // pred_region
          %s627 = sand.u32 %s110, 1
          %s628 = scalar_lea.sflag [#allocation3], %s627
          %s629 = sand.u32 %s110, 1
          %s630 = smul.addr %s629, 256
          %s631 = scalar_lea.vmem [#allocation2], %s630
          %632 = dma.done %s628, 4096
        $region44: #{tpu_custom_call.1} parent=39 // pred_fallthru
          _
      $region40: #{tpu_custom_call.1} parent=5 // pred_fallthru
        _
    $region6: #{tpu_custom_call.1} parent=1 // loop_footer
      %s16 = sadd.s32 1, %s12
    $region7: #{tpu_custom_call.1} parent=1 // loop_footer_branch
      %11 = sbr.rel target = $region3
    $region8: #{tpu_custom_call.1} parent=1 // loop_exit
      _
    %633 = vsyncpa [#allocation3], 1
    %s634 = scalar_lea.sflag [#allocation3], 1
    %635 = vsyncpa %s634, 1

</llo_original>
